<compile_context>
chip_gen: v5e
topology: v5e:2x2
jax: 0.10.0
libtpu: 0.0.40
codegen_flags: <defaults>
</compile_context>

<pallas_src>
import jax
import jax.numpy as jnp
from jax.experimental import pallas as pl
from jax.experimental.pallas import tpu as pltpu


def _locked_dropout_kernel(x_ref, m_ref, o_ref):
    # x_ref: (tt, tbh) tile of the input stream.
    # m_ref: (1, tbh) scaled keep-mask in x.dtype, broadcast over time rows.
    o_ref[...] = x_ref[...] * m_ref[...]


def _round_up(a, b):
    return ((a + b - 1) // b) * b


def _target_block_bytes():
    """Per-generation block-size target (bytes).

    v7x (64 MiB VMEM/TC, ~3.2 TB/s HBM, 32 MiB scoped default) hides the
    ~0.35 us/step grid overhead better with ~4 MiB blocks; v5e's 16 MiB
    scoped default keeps us at 2 MiB (8 MiB double-buffered in+out).
    """
    try:
        info = pltpu.get_tpu_info()
        vmem = getattr(info, "vmem_capacity_bytes", None)
        if vmem is not None and vmem <= 64 * 1024 * 1024:
            return 4 * 1024 * 1024   # v7x
    except Exception:
        pass
    return 2 * 1024 * 1024           # v5e / v6e safe default


def _block_sizes(T, BH, itemsize, target_bytes):
    """Pick (tt, tbh) with tt*tbh*itemsize ~ target_bytes.

    tt is a multiple of the dtype-native sublane tile (or == T); tbh is a
    multiple of 128 lanes (or == BH), so there is no relayout and no masked
    partial store except possibly on the final edge tile.
    """
    sm = max(8, 32 // itemsize)          # 8 (f32), 16 (bf16/f16), 32 (int8/fp8)
    lane = 128
    row_bytes = BH * itemsize
    total_bytes = T * row_bytes

    if total_bytes <= target_bytes:
        # Whole tensor fits one block; still give the time axis >= 2 steps
        # (when T permits) so v7x can shard the grid across both TensorCores.
        tbh = BH
        tt = _round_up(pl.cdiv(T, 2), sm) if T >= 2 * sm else T
    elif sm * row_bytes <= target_bytes:
        # Tile time only; keep the full lane-dense B*H row.
        tbh = BH
        tt = max(sm, (target_bytes // row_bytes) // sm * sm)
    else:
        # Rows themselves are huge: also tile the lane axis so the
        # double-buffered footprint stays inside the scoped-VMEM default.
        tt = min(sm, T)
        tbh = (target_bytes // (tt * itemsize)) // lane * lane
        tbh = max(4 * lane, min(tbh, BH))
    return tt, tbh


def locked_dropout(x, key, dropout=0.5, training=True, donate_input=False):
    """JAX/Pallas equivalent of LockedDropout.forward(x, dropout)."""
    if (not training) or (not dropout):
        return x

    keep_prob = 1.0 - float(dropout)
    T, B, H = x.shape
    BH = B * H
    itemsize = jnp.dtype(x.dtype).itemsize

    # One-shot mask prologue: Bernoulli(keep_prob), pre-scaled by 1/keep_prob,
    # pre-cast to x.dtype (no per-step casts inside the streaming loop).
    keep = jax.random.bernoulli(key, p=keep_prob, shape=(1, BH))
    mask = keep.astype(x.dtype) * jnp.asarray(1.0 / keep_prob, dtype=x.dtype)

    # Lane-dense 2D view of the input stream.
    x2 = x.reshape(T, BH)

    tt, tbh = _block_sizes(T, BH, itemsize, _target_block_bytes())
    grid = (pl.cdiv(T, tt), pl.cdiv(BH, tbh))

    out2 = pl.pallas_call(
        _locked_dropout_kernel,
        out_shape=jax.ShapeDtypeStruct((T, BH), x.dtype),
        grid=grid,
        in_specs=[
            pl.BlockSpec((tt, tbh), lambda i, j: (i, j)),   # streamed input
            pl.BlockSpec((1, tbh), lambda i, j: (0, j)),    # resident mask row
        ],
        out_specs=pl.BlockSpec((tt, tbh), lambda i, j: (i, j)),
        compiler_params=pltpu.CompilerParams(
            # No cross-step state -> both axes can be split across cores.
            dimension_semantics=("parallel", "parallel"),
        ),
        cost_estimate=pl.CostEstimate(
            flops=T * BH,
            transcendentals=0,
            bytes_accessed=2 * T * BH * itemsize + BH * itemsize,
        ),
        # x2 -> output aliasing when the caller can donate x (halves the HBM
        # footprint for large activations; bytes streamed are unchanged).
        input_output_aliases=({0: 0} if donate_input else {}),
    )(x2, mask)

    return out2.reshape(T, B, H)


if __name__ == "__main__":
    key = jax.random.PRNGKey(0)
    kx, kmask = jax.random.split(key)

    T, B, H = 8, 4, 32
    x = jax.random.normal(kx, (T, B, H), dtype=jnp.float32)

    dropout = 0.5
    keep_prob = 1.0 - dropout

    out = locked_dropout(x, kmask, dropout=dropout, training=True)
    out = jax.block_until_ready(out)

    # Shape/dtype preserved.
    assert out.shape == x.shape and out.dtype == x.dtype

    # Reference: recompute the (deterministic) mask the wrapper drew and
    # compare against the broadcast product directly (no division by
    # near-zero inputs).
    keep = jax.random.bernoulli(kmask, p=keep_prob, shape=(1, B * H))
    mask_ref = (
        keep.astype(x.dtype) * jnp.asarray(1.0 / keep_prob, dtype=x.dtype)
    ).reshape(1, B, H)
    assert bool(jnp.allclose(out, x * mask_ref, rtol=1e-6, atol=1e-6))
    # Mask values are only {0, 1/keep}; locked-ness across T is implied by
    # the broadcasted reference above.
    assert bool(
        jnp.all(jnp.isclose(mask_ref, 0.0) | jnp.isclose(mask_ref, 1.0 / keep_prob))
    )

    # Second small shape: non-128-multiple lanes + >= 2 time tiles.
    T2, B2, H2 = 16, 3, 40
    x_b = jax.random.normal(kx, (T2, B2, H2), dtype=jnp.float32)
    out_b = jax.block_until_ready(locked_dropout(x_b, kmask, dropout=0.3))
    keep_b = jax.random.bernoulli(kmask, p=0.7, shape=(1, B2 * H2))
    mask_b = (
        keep_b.astype(x_b.dtype) * jnp.asarray(1.0 / 0.7, dtype=x_b.dtype)
    ).reshape(1, B2, H2)
    assert bool(jnp.allclose(out_b, x_b * mask_b, rtol=1e-6, atol=1e-6))

    # eval-mode / dropout=0 pass-through.
    assert bool(
        jnp.array_equal(locked_dropout(x, kmask, dropout=0.5, training=False), x)
    )
    assert bool(
        jnp.array_equal(locked_dropout(x, kmask, dropout=0.0, training=True), x)
    )

    print("KERNEL_OK")
</pallas_src>

<mosaic_0001>
module attributes {stable_mosaic.version = 11 : i64} {
  func.func @_locked_dropout_kernel(%arg0: i32, %arg1: i32, %arg2: memref<8x128xf32, #tpu.memory_space<vmem>>, %arg3: memref<1x128xf32, #tpu.memory_space<vmem>>, %arg4: memref<8x128xf32, #tpu.memory_space<vmem>>) attributes {dimension_semantics = [#tpu.dimension_semantics<parallel>, #tpu.dimension_semantics<parallel>], iteration_bounds = array<i64: 1, 1>, scalar_prefetch = 0 : i64, scratch_operands = 0 : i64, tpu.core_type = #tpu.core_type<tc>, window_params = [{transform_indices = @transform_0, window_bounds = array<i64: 8, 128>}, {transform_indices = @transform_1, window_bounds = array<i64: 1, 128>}, {transform_indices = @transform_2, window_bounds = array<i64: 8, 128>}]} {
    %c0 = arith.constant 0 : index
    %c0_0 = arith.constant 0 : index
    %0 = vector.load %arg2[%c0, %c0_0] : memref<8x128xf32, #tpu.memory_space<vmem>>, vector<8x128xf32>
    %c0_1 = arith.constant 0 : index
    %c0_2 = arith.constant 0 : index
    %1 = vector.load %arg3[%c0_1, %c0_2] : memref<1x128xf32, #tpu.memory_space<vmem>>, vector<1x128xf32>
    %2 = vector.broadcast %1 : vector<1x128xf32> to vector<8x128xf32>
    %3 = arith.mulf %0, %2 : vector<8x128xf32>
    %c0_3 = arith.constant 0 : index
    %c0_4 = arith.constant 0 : index
    %4 = vector.load %arg4[%c0_3, %c0_4] : memref<8x128xf32, #tpu.memory_space<vmem>>, vector<8x128xf32>
    tpu.vector_store %arg4[%c0_3, %c0_4], %3 {strides = array<i32>} : memref<8x128xf32, #tpu.memory_space<vmem>>, vector<8x128xf32>,
    return
  }
  func.func @transform_0(%arg0: i32, %arg1: i32) -> (i32, i32) {
    %c0_i32 = arith.constant 0 : i32
    return %arg0, %arg1 : i32, i32
  }
  func.func @transform_1(%arg0: i32, %arg1: i32) -> (i32, i32) {
    %c0_i32 = arith.constant 0 : i32
    %c0_i32_0 = arith.constant 0 : i32
    return %c0_i32, %arg1 : i32, i32
  }
  func.func @transform_2(%arg0: i32, %arg1: i32) -> (i32, i32) {
    %c0_i32 = arith.constant 0 : i32
    return %arg0, %arg1 : i32, i32
  }
}

</mosaic_0001>

<llo_original>
// kernel: tpu_custom_call.1
$region0: #{tpu_custom_call.1}
  #allocation0 [shape = 'u32[]', space=smem, size = 0x4, offset = 0x4, fixed_abs, tag = 'smem constant byte address 0x4 - core index']
  #allocation1 [shape = 'u32[72,128]{1,0:T(1,128)}', space=vmem, size = 0x9000, scoped, tag = 'internal scratch']
  %s0 = inlined_call_operand.hbm [shape: f32[8,128], index: 0, kind: input, shape index: {}]
  %s1 = inlined_call_operand.hbm [shape: f32[1,128], index: 1, kind: input, shape index: {}]
  %s2 = inlined_call_operand.hbm [shape: f32[8,128], index: 2, kind: output, shape index: {}]
  %s3 = sld [smem:[#allocation0]]
  $region26: #{tpu_custom_call.1} parent=0
    _
  %s5 = ssub.s32 1, %s3
  %s6 = scalar_select 0, %s5, %s3
  $region1: #{tpu_custom_call.1} parent=0
    #allocation2 [shape = 'u8[4096]{0}', space=vmem, size = 0x1000, scoped, tag = 'input window, operand 0, single buffered']
    #allocation3 [shape = 's32[1]{0}', space=sflag, size = 0x4, scoped, tag = 'scoped memory for tpu_custom_call.1']
    #allocation4 [shape = 's32[1]{0}', space=sflag, size = 0x4, scoped, tag = 'scoped memory for tpu_custom_call.1']
    #allocation5 [shape = 'u8[512]{0}', space=vmem, size = 0x400, scoped, tag = 'input window, operand 1, single buffered']
    #allocation6 [shape = 's32[1]{0}', space=sflag, size = 0x4, scoped, tag = 'scoped memory for tpu_custom_call.1']
    #allocation7 [shape = 'u8[4096]{0}', space=vmem, size = 0x1000, scoped, tag = 'output window, operand 0, single buffered']
    %7 = vsyncpa [#allocation3], 0
    %8 = vsyncpa [#allocation6], 0
    %9 = vsyncpa [#allocation4], 0
    // Predicated region
    $region2: #{tpu_custom_call.1} parent=1 // pred_check
      _
    $region3: #{tpu_custom_call.1} parent=1 // pred_check_branch
      %11 = sbr.rel (0) target = $region5
    $region4: #{tpu_custom_call.1} parent=1 // pred_region
      %13 = vsyncadd [#allocation3], 0
      %s15 = sshll.u32 %s0, 4
      %s16 = int_to_ptr.hbm [resolvable:$true] %s15
      %s17 = sshll.u32 [#allocation2], 4
      %s18 = int_to_ptr.vmem [resolvable:$true] %s17
      %20 = dma.hbm_to_vmem [thread:$0]  %s16, 128, %s18, [#allocation3]
    $region5: #{tpu_custom_call.1} parent=1 // pred_fallthru
      _
    // Predicated region
    $region6: #{tpu_custom_call.1} parent=1 // pred_check
      _
    $region7: #{tpu_custom_call.1} parent=1 // pred_check_branch
      %22 = sbr.rel (0) target = $region9
    $region8: #{tpu_custom_call.1} parent=1 // pred_region
      %24 = vsyncadd [#allocation6], 0
      %s26 = sshll.u32 %s1, 4
      %s27 = int_to_ptr.hbm [resolvable:$true] %s26
      %s28 = sshll.u32 [#allocation5], 4
      %s29 = int_to_ptr.vmem [resolvable:$true] %s28
      %31 = dma.hbm_to_vmem [thread:$0]  %s27, 16, %s29, [#allocation6]
    $region9: #{tpu_custom_call.1} parent=1 // pred_fallthru
      _
    // Predicated region
    $region10: #{tpu_custom_call.1} parent=1 // pred_check
      _
    $region11: #{tpu_custom_call.1} parent=1 // pred_check_branch
      %33 = sbr.rel (0) target = $region13
    $region12: #{tpu_custom_call.1} parent=1 // pred_region
      %35 = dma.done [#allocation3], 128
    $region13: #{tpu_custom_call.1} parent=1 // pred_fallthru
      _
    // Predicated region
    $region14: #{tpu_custom_call.1} parent=1 // pred_check
      _
    $region15: #{tpu_custom_call.1} parent=1 // pred_check_branch
      %37 = sbr.rel (0) target = $region17
    $region16: #{tpu_custom_call.1} parent=1 // pred_region
      %39 = dma.done [#allocation6], 16
    $region17: #{tpu_custom_call.1} parent=1 // pred_fallthru
      _
    %v40 = vld [vmem:[#allocation2] sm:$0xff]
    %v41 = vld [vmem:[#allocation5] sm:$0x1]
    %v43 = vperm.slane %v41, 0
    %v45 = vmul.f32 %v40, %v43
    %46 = vst [vmem:[#allocation7] sm:$0xff] %v45
    // Predicated region
    $region18: #{tpu_custom_call.1} parent=1 // pred_check
      _
    $region19: #{tpu_custom_call.1} parent=1 // pred_check_branch
      %48 = sbr.rel (0) target = $region21
    $region20: #{tpu_custom_call.1} parent=1 // pred_region
      %50 = vsyncadd [#allocation4], 0
      %s52 = sshll.u32 [#allocation7], 4
      %s53 = int_to_ptr.vmem [resolvable:$true] %s52
      %s54 = sshll.u32 %s2, 4
      %s55 = int_to_ptr.hbm [resolvable:$true] %s54
      %57 = dma.vmem_to_hbm [thread:$0]  %s53, 128, %s55, [#allocation4]
    $region21: #{tpu_custom_call.1} parent=1 // pred_fallthru
      _
    // Predicated region
    $region22: #{tpu_custom_call.1} parent=1 // pred_check
      _
    $region23: #{tpu_custom_call.1} parent=1 // pred_check_branch
      %59 = sbr.rel (0) target = $region25
    $region24: #{tpu_custom_call.1} parent=1 // pred_region
      %61 = dma.done [#allocation4], 128
    $region25: #{tpu_custom_call.1} parent=1 // pred_fallthru
      _
    %62 = vsyncpa [#allocation3], 1
    %63 = vsyncpa [#allocation6], 1
    %64 = vsyncpa [#allocation4], 1

</llo_original>
